<compile_context>
chip_gen: v5e
topology: v5e:2x2
jax: 0.10.0
libtpu: 0.0.40
codegen_flags: <defaults>
</compile_context>

<pallas_src>
import functools

import jax
import jax.numpy as jnp
from jax.experimental import pallas as pl
from jax.experimental.pallas import tpu as pltpu


def _round_up(a: int, b: int) -> int:
    return (a + b - 1) // b * b


def _pad_2d(a, rows, cols):
    pr, pc = rows - a.shape[0], cols - a.shape[1]
    if pr == 0 and pc == 0:
        return a
    return jnp.pad(a, ((0, pr), (0, pc)))


def _pad_1d(a, n):
    p = n - a.shape[0]
    return a if p == 0 else jnp.pad(a, (0, p))


def _activate(h, activation, approx_gelu):
    if activation == "relu":
        return jnp.maximum(h, 0.0)
    # PyTorch F.gelu default is the exact (erf) form; tanh approx optional (EUP path).
    return jax.nn.gelu(h, approximate=approx_gelu)


def _hw_params():
    """Per-TPU-generation tile-M / VMEM budgets (conservative fallback otherwise)."""
    kind = ""
    try:
        kind = jax.devices()[0].device_kind.lower()
    except Exception:
        pass
    if "v7" in kind:
        # 64 MiB physical VMEM per TensorCore: smaller tiles, leave compiler headroom.
        return dict(tile_m=512, vmem_budget=36 << 20, vmem_limit=52 << 20)
    if "v6" in kind:
        # 128 MiB VMEM; 918 TF/s vs ~1.35 TB/s -> ridge ~680 FLOP/B: big M tiles.
        return dict(tile_m=1024, vmem_budget=80 << 20, vmem_limit=100 << 20)
    # v5e and unknown devices: 128 MiB VMEM, lower ridge (~240 FLOP/B).
    return dict(tile_m=512, vmem_budget=80 << 20, vmem_limit=100 << 20)


def _pick_tile_f(dfp: int, max_tf: int) -> int:
    """Largest 128-multiple tile <= max_tf with minimum d_ff padding waste."""
    max_tf = max(128, min(max_tf, dfp))
    best_tf, best_waste = 128, (-dfp) % 128
    for tf in range(128, max_tf + 1, 128):
        waste = (-dfp) % tf
        if waste < best_waste or (waste == best_waste and tf > best_tf):
            best_tf, best_waste = tf, waste
    return best_tf


def _ffn_resident_kernel(x_ref, w1_ref, b1_ref, w2_ref, b2_ref, o_ref, *,
                         activation, approx_gelu):
    # Whole W1/W2 live in VMEM for the entire grid (constant index_map); one M tile here.
    h = jnp.dot(x_ref[...], w1_ref[...], preferred_element_type=jnp.float32)
    h = h + b1_ref[...].astype(jnp.float32)
    h = _activate(h, activation, approx_gelu)
    # TODO(synk): training-mode dropout would use pltpu.prng_seed + pltpu.stateful_bernoulli.
    out = jnp.dot(h.astype(w2_ref.dtype), w2_ref[...], preferred_element_type=jnp.float32)
    o_ref[...] = (out + b2_ref[...].astype(jnp.float32)).astype(o_ref.dtype)


def _ffn_stream_kernel(x_ref, w1_ref, b1_ref, w2_ref, b2_ref, o_ref, *scratch,
                       activation, approx_gelu):
    # 2-D grid: (M tiles, d_ff tiles).  Accumulator is resident across the d_ff axis;
    # for f32 outputs we accumulate directly in o_ref (no scratch passed).
    acc_ref = scratch[0] if scratch else o_ref
    f = pl.program_id(1)

    @pl.when(f == 0)
    def _():
        acc_ref[...] = jnp.zeros_like(acc_ref)

    h = jnp.dot(x_ref[...], w1_ref[...], preferred_element_type=jnp.float32)
    h = h + b1_ref[...].astype(jnp.float32)
    h = _activate(h, activation, approx_gelu)
    # TODO(synk): training-mode dropout would use pltpu.prng_seed + pltpu.stateful_bernoulli.
    acc_ref[...] += jnp.dot(h.astype(w2_ref.dtype), w2_ref[...],
                            preferred_element_type=jnp.float32)

    @pl.when(f == pl.num_programs(1) - 1)
    def _():
        o_ref[...] = (acc_ref[...] + b2_ref[...].astype(jnp.float32)).astype(o_ref.dtype)


def ffn_forward(x, w1, b1, w2, b2, *, activation="relu", approx_gelu=False,
                tile_m=None, max_tile_f=512, weights_resident=None,
                compute_dtype=None):
    """x: (B, L, d_model). w1: (d_model, d_ff), b1: (d_ff,), w2: (d_ff, d_model), b2: (d_model,)."""
    B, L, d_model = x.shape
    d_ff = w1.shape[1]
    M = B * L

    hw = _hw_params()
    if tile_m is None:
        tile_m = hw["tile_m"]
    vmem_budget = hw["vmem_budget"]
    vmem_limit = hw["vmem_limit"]

    if compute_dtype is not None:
        # Optional mixed precision (bf16 MXU operands); accumulation stays f32 in-kernel.
        x = x.astype(compute_dtype)
        w1 = w1.astype(compute_dtype)
        w2 = w2.astype(compute_dtype)

    out_dtype = x.dtype
    x_bytes = jnp.dtype(x.dtype).itemsize
    out_bytes = jnp.dtype(out_dtype).itemsize
    w_bytes = jnp.dtype(w1.dtype).itemsize

    tm = min(tile_m, _round_up(M, 128))
    dm = _round_up(d_model, 128)
    dfp = _round_up(d_ff, 128)

    # Can the full (padded) weights + one M tile of x/out/h live in the VMEM budget?
    resident_bytes = (
        2 * tm * dm * (x_bytes + out_bytes)     # x + out blocks (double-buffered)
        + 2 * 2 * dm * dfp * w_bytes            # W1 + W2 (counted double-buffered, conservative)
        + 2 * (dfp + dm) * 4                    # biases
        + tm * dfp * (4 + w_bytes)              # h f32 temp + cast copy
    )
    if weights_resident is None:
        weights_resident = resident_bytes <= vmem_budget

    cost = pl.CostEstimate(
        flops=4 * M * d_model * d_ff,
        transcendentals=(0 if activation == "relu" else M * d_ff),
        bytes_accessed=(M * d_model * (x_bytes + out_bytes)
                        + 2 * d_model * d_ff * w_bytes + (d_ff + d_model) * 4),
    )
    x2d = x.reshape(M, d_model)

    if weights_resident:
        df = dfp
        mp = _round_up(M, tm)
        xp = _pad_2d(x2d, mp, dm)
        w1p = _pad_2d(w1, dm, df)
        b1p = _pad_1d(b1, df).reshape(1, df)
        w2p = _pad_2d(w2, df, dm)
        b2p = _pad_1d(b2, dm).reshape(1, dm)

        kernel = functools.partial(_ffn_resident_kernel, activation=activation,
                                   approx_gelu=approx_gelu)
        grid_spec = pltpu.PrefetchScalarGridSpec(
            num_scalar_prefetch=0,
            grid=(mp // tm,),
            in_specs=[
                pl.BlockSpec((tm, dm), lambda i: (i, 0)),   # x rows
                pl.BlockSpec((dm, df), lambda i: (0, 0)),   # full W1 (DMA'd once)
                pl.BlockSpec((1, df), lambda i: (0, 0)),    # b1
                pl.BlockSpec((df, dm), lambda i: (0, 0)),   # full W2 (DMA'd once)
                pl.BlockSpec((1, dm), lambda i: (0, 0)),    # b2
            ],
            out_specs=pl.BlockSpec((tm, dm), lambda i: (i, 0)),
            scratch_shapes=[],
        )
        dim_sem = ("parallel",)
    else:
        acc_in_out = jnp.dtype(out_dtype) == jnp.dtype(jnp.float32)
        tf = _pick_tile_f(dfp, max_tile_f)

        def stream_bytes(tm_, tf_):
            return (2 * tm_ * dm * (x_bytes + out_bytes)
                    + 2 * 2 * dm * tf_ * w_bytes
                    + 2 * (tf_ + dm) * 4
                    + (0 if acc_in_out else tm_ * dm * 4)
                    + tm_ * tf_ * (4 + w_bytes))

        # Auto-shrink when VMEM-tight (large d_model / d_ff).
        while stream_bytes(tm, tf) > vmem_budget and tf > 128:
            tf -= 128
        while stream_bytes(tm, tf) > vmem_budget and tm > 128:
            tm = max(128, tm // 2)
        # TODO(synk): add a third (d_model) tile axis for extreme d_model instead of only
        # shrinking tm/tf.

        mp = _round_up(M, tm)
        df = _round_up(dfp, tf)
        xp = _pad_2d(x2d, mp, dm)
        w1p = _pad_2d(w1, dm, df)
        b1p = _pad_1d(b1, df).reshape(1, df)
        w2p = _pad_2d(w2, df, dm)
        b2p = _pad_1d(b2, dm).reshape(1, dm)

        kernel = functools.partial(_ffn_stream_kernel, activation=activation,
                                   approx_gelu=approx_gelu)
        grid_spec = pltpu.PrefetchScalarGridSpec(
            num_scalar_prefetch=0,
            grid=(mp // tm, df // tf),
            in_specs=[
                pl.BlockSpec((tm, dm), lambda i, f: (i, 0)),   # x rows (constant over f)
                pl.BlockSpec((dm, tf), lambda i, f: (0, f)),   # W1 d_ff slice (streamed)
                pl.BlockSpec((1, tf), lambda i, f: (0, f)),    # b1 d_ff slice
                pl.BlockSpec((tf, dm), lambda i, f: (f, 0)),   # W2 d_ff slice (streamed)
                pl.BlockSpec((1, dm), lambda i, f: (0, 0)),    # b2 (constant)
            ],
            out_specs=pl.BlockSpec((tm, dm), lambda i, f: (i, 0)),
            scratch_shapes=([] if acc_in_out
                            else [pltpu.VMEM((tm, dm), jnp.float32)]),
        )
        dim_sem = ("parallel", "arbitrary")

    out = pl.pallas_call(
        kernel,
        out_shape=jax.ShapeDtypeStruct((mp, dm), out_dtype),
        grid_spec=grid_spec,
        compiler_params=pltpu.CompilerParams(
            dimension_semantics=dim_sem,
            vmem_limit_bytes=vmem_limit,
        ),
        cost_estimate=cost,
    )(xp, w1p, b1p, w2p, b2p)

    return out[:M, :d_model].reshape(B, L, d_model)


def _reference(x, w1, b1, w2, b2, activation="relu"):
    h = jnp.einsum("bld,df->blf", x, w1) + b1
    h = jnp.maximum(h, 0.0) if activation == "relu" else jax.nn.gelu(h, approximate=False)
    return jnp.einsum("blf,fd->bld", h, w2) + b2


if __name__ == "__main__":
    # Small shapes consistent with the module's forward: x is (batch, seq, d_model).
    B, L = 2, 8
    d_model, d_ff = 32, 64

    key = jax.random.PRNGKey(0)
    kx, k1, k2, k3, k4 = jax.random.split(key, 5)

    x = jax.random.normal(kx, (B, L, d_model), dtype=jnp.float32)
    # Conv1d weight (out, in, 1) collapsed to (in, out) matmul form.
    w1 = jax.random.normal(k1, (d_model, d_ff), dtype=jnp.float32) * 0.05
    b1 = jax.random.normal(k2, (d_ff,), dtype=jnp.float32) * 0.01
    w2 = jax.random.normal(k3, (d_ff, d_model), dtype=jnp.float32) * 0.05
    b2 = jax.random.normal(k4, (d_model,), dtype=jnp.float32) * 0.01

    # 1) ReLU, auto path (weights are tiny -> VMEM-resident fast path).
    out = jax.block_until_ready(ffn_forward(x, w1, b1, w2, b2, activation="relu"))
    ref = _reference(x, w1, b1, w2, b2, activation="relu")
    assert out.shape == (B, L, d_model)
    assert jnp.allclose(out, ref, atol=1e-5, rtol=1e-5), "relu/resident mismatch"

    # 2) ReLU, forced d_ff-streaming path (exercises the 2-D grid + in-place f32 acc).
    out_s = jax.block_until_ready(
        ffn_forward(x, w1, b1, w2, b2, activation="relu", weights_resident=False))
    assert jnp.allclose(out_s, ref, atol=1e-5, rtol=1e-5), "relu/stream mismatch"

    # 3) Exact-erf GELU (PyTorch F.gelu default), auto path.
    out_g = jax.block_until_ready(ffn_forward(x, w1, b1, w2, b2, activation="gelu"))
    ref_g = _reference(x, w1, b1, w2, b2, activation="gelu")
    assert jnp.allclose(out_g, ref_g, atol=1e-5, rtol=1e-5), "gelu mismatch"

    print("KERNEL_OK")
</pallas_src>

<mosaic_0001>
module attributes {stable_mosaic.version = 11 : i64} {
  func.func @_ffn_resident_kernel(%arg0: i32, %arg1: memref<128x128xf32, #tpu.memory_space<vmem>>, %arg2: memref<128x128xf32, #tpu.memory_space<vmem>>, %arg3: memref<1x128xf32, #tpu.memory_space<vmem>>, %arg4: memref<128x128xf32, #tpu.memory_space<vmem>>, %arg5: memref<1x128xf32, #tpu.memory_space<vmem>>, %arg6: memref<128x128xf32, #tpu.memory_space<vmem>>) attributes {dimension_semantics = [#tpu.dimension_semantics<parallel>], iteration_bounds = array<i64: 1>, scalar_prefetch = 0 : i64, scratch_operands = 0 : i64, tpu.core_type = #tpu.core_type<tc>, window_params = [{transform_indices = @transform_0, window_bounds = array<i64: 128, 128>}, {pipeline_mode = #tpu.pipeline_mode<synchronous>, transform_indices = @transform_1, window_bounds = array<i64: 128, 128>}, {pipeline_mode = #tpu.pipeline_mode<synchronous>, transform_indices = @transform_2, window_bounds = array<i64: 1, 128>}, {pipeline_mode = #tpu.pipeline_mode<synchronous>, transform_indices = @transform_3, window_bounds = array<i64: 128, 128>}, {pipeline_mode = #tpu.pipeline_mode<synchronous>, transform_indices = @transform_4, window_bounds = array<i64: 1, 128>}, {transform_indices = @transform_5, window_bounds = array<i64: 128, 128>}]} {
    %c0 = arith.constant 0 : index
    %c0_0 = arith.constant 0 : index
    %0 = vector.load %arg1[%c0, %c0_0] : memref<128x128xf32, #tpu.memory_space<vmem>>, vector<128x128xf32>
    %c0_1 = arith.constant 0 : index
    %c0_2 = arith.constant 0 : index
    %1 = vector.load %arg2[%c0_1, %c0_2] : memref<128x128xf32, #tpu.memory_space<vmem>>, vector<128x128xf32>
    %cst = arith.constant dense<0.000000e+00> : vector<128x128xf32>
    %2 = tpu.matmul %0, %1, %cst {dimension_numbers = #tpu.dot_dimension_numbers<[1], [0], [0], [1], [0, 0, 1, 1], [], []>} : vector<128x128xf32>, vector<128x128xf32>, vector<128x128xf32> -> vector<128x128xf32>
    %c0_3 = arith.constant 0 : index
    %c0_4 = arith.constant 0 : index
    %3 = vector.load %arg3[%c0_3, %c0_4] : memref<1x128xf32, #tpu.memory_space<vmem>>, vector<1x128xf32>
    %4 = vector.broadcast %3 : vector<1x128xf32> to vector<128x128xf32>
    %5 = arith.addf %2, %4 : vector<128x128xf32>
    %cst_5 = arith.constant 0.000000e+00 : f32
    %6 = vector.broadcast %cst_5 : f32 to vector<128x128xf32>
    %7 = arith.maximumf %5, %6 : vector<128x128xf32>
    %c0_6 = arith.constant 0 : index
    %c0_7 = arith.constant 0 : index
    %8 = vector.load %arg4[%c0_6, %c0_7] : memref<128x128xf32, #tpu.memory_space<vmem>>, vector<128x128xf32>
    %cst_8 = arith.constant dense<0.000000e+00> : vector<128x128xf32>
    %9 = tpu.matmul %7, %8, %cst_8 {dimension_numbers = #tpu.dot_dimension_numbers<[1], [0], [0], [1], [0, 0, 1, 1], [], []>} : vector<128x128xf32>, vector<128x128xf32>, vector<128x128xf32> -> vector<128x128xf32>
    %c0_9 = arith.constant 0 : index
    %c0_10 = arith.constant 0 : index
    %10 = vector.load %arg5[%c0_9, %c0_10] : memref<1x128xf32, #tpu.memory_space<vmem>>, vector<1x128xf32>
    %11 = vector.broadcast %10 : vector<1x128xf32> to vector<128x128xf32>
    %12 = arith.addf %9, %11 : vector<128x128xf32>
    %c0_11 = arith.constant 0 : index
    %c0_12 = arith.constant 0 : index
    %13 = vector.load %arg6[%c0_11, %c0_12] : memref<128x128xf32, #tpu.memory_space<vmem>>, vector<128x128xf32>
    tpu.vector_store %arg6[%c0_11, %c0_12], %12 {strides = array<i32>} : memref<128x128xf32, #tpu.memory_space<vmem>>, vector<128x128xf32>,
    return
  }
  func.func @transform_0(%arg0: i32) -> (i32, i32) {
    %c0_i32 = arith.constant 0 : i32
    %c0_i32_0 = arith.constant 0 : i32
    return %arg0, %c0_i32 : i32, i32
  }
  func.func @transform_1(%arg0: i32) -> (i32, i32) {
    %c0_i32 = arith.constant 0 : i32
    %c0_i32_0 = arith.constant 0 : i32
    %c0_i32_1 = arith.constant 0 : i32
    return %c0_i32, %c0_i32_0 : i32, i32
  }
  func.func @transform_2(%arg0: i32) -> (i32, i32) {
    %c0_i32 = arith.constant 0 : i32
    %c0_i32_0 = arith.constant 0 : i32
    %c0_i32_1 = arith.constant 0 : i32
    return %c0_i32, %c0_i32_0 : i32, i32
  }
  func.func @transform_3(%arg0: i32) -> (i32, i32) {
    %c0_i32 = arith.constant 0 : i32
    %c0_i32_0 = arith.constant 0 : i32
    %c0_i32_1 = arith.constant 0 : i32
    return %c0_i32, %c0_i32_0 : i32, i32
  }
  func.func @transform_4(%arg0: i32) -> (i32, i32) {
    %c0_i32 = arith.constant 0 : i32
    %c0_i32_0 = arith.constant 0 : i32
    %c0_i32_1 = arith.constant 0 : i32
    return %c0_i32, %c0_i32_0 : i32, i32
  }
  func.func @transform_5(%arg0: i32) -> (i32, i32) {
    %c0_i32 = arith.constant 0 : i32
    %c0_i32_0 = arith.constant 0 : i32
    return %arg0, %c0_i32 : i32, i32
  }
}

</mosaic_0001>

<llo_original>
// kernel: tpu_custom_call.1
$region0: #{tpu_custom_call.1}
  #allocation0 [shape = 'u32[]', space=smem, size = 0x4, offset = 0x4, fixed_abs, tag = 'smem constant byte address 0x4 - core index']
  #allocation1 [shape = 'u32[72,128]{1,0:T(1,128)}', space=vmem, size = 0x9000, scoped, tag = 'internal scratch']
  %s0 = inlined_call_operand.hbm [shape: f32[128,128], index: 0, kind: input, shape index: {}]
  %s1 = inlined_call_operand.hbm [shape: f32[128,128], index: 1, kind: input, shape index: {}]
  %s2 = inlined_call_operand.vmem [shape: f32[1,128], index: 2, kind: input, shape index: {}]
  %s3 = inlined_call_operand.hbm [shape: f32[128,128], index: 3, kind: input, shape index: {}]
  %s4 = inlined_call_operand.vmem [shape: f32[1,128], index: 4, kind: input, shape index: {}]
  %s5 = inlined_call_operand.hbm [shape: f32[128,128], index: 5, kind: output, shape index: {}]
  %s6 = sld [smem:[#allocation0]]
  $region42: #{tpu_custom_call.1} parent=0
    _
  %s8 = ssub.s32 1, %s6
  %s9 = scalar_select 0, %s8, %s6
  $region1: #{tpu_custom_call.1} parent=0
    #allocation2 [shape = 'u8[65536]{0}', space=vmem, size = 0x10000, scoped, tag = 'input window, operand 0, single buffered']
    #allocation3 [shape = 's32[1]{0}', space=sflag, size = 0x4, scoped, tag = 'scoped memory for tpu_custom_call.1']
    #allocation4 [shape = 's32[1]{0}', space=sflag, size = 0x4, scoped, tag = 'scoped memory for tpu_custom_call.1']
    #allocation5 [shape = 'u8[65536]{0}', space=vmem, size = 0x10000, scoped, tag = 'input window, operand 1, single buffered']
    #allocation6 [shape = 's32[1]{0}', space=sflag, size = 0x4, scoped, tag = 'scoped memory for tpu_custom_call.1']
    #allocation7 [shape = 'u8[65536]{0}', space=vmem, size = 0x10000, scoped, tag = 'input window, operand 3, single buffered']
    #allocation8 [shape = 'u8[65536]{0}', space=vmem, size = 0x10000, scoped, tag = 'output window, operand 0, single buffered']
    %10 = vsyncpa [#allocation3], 0
    %11 = vsyncpa [#allocation6], 0
    %12 = vsyncpa [#allocation4], 0
    // Predicated region
    $region2: #{tpu_custom_call.1} parent=1 // pred_check
      _
    $region3: #{tpu_custom_call.1} parent=1 // pred_check_branch
      %14 = sbr.rel (0) target = $region5
    $region4: #{tpu_custom_call.1} parent=1 // pred_region
      %16 = vsyncadd [#allocation3], 0
      %s17 = sshll.u32 %s0, 4
      %s18 = int_to_ptr.hbm [resolvable:$true] %s17
      %s19 = sshll.u32 [#allocation2], 4
      %s20 = int_to_ptr.vmem [resolvable:$true] %s19
      %25 = dma.hbm_to_vmem [thread:$0]  %s18, 2048, %s20, [#allocation3], 128, 128, 8
    $region5: #{tpu_custom_call.1} parent=1 // pred_fallthru
      _
    // Predicated region
    $region6: #{tpu_custom_call.1} parent=1 // pred_check
      _
    $region7: #{tpu_custom_call.1} parent=1 // pred_check_branch
      %27 = sbr.rel (0) target = $region9
    $region8: #{tpu_custom_call.1} parent=1 // pred_region
      %29 = vsyncadd [#allocation6], 0
      %s30 = sshll.u32 %s1, 4
      %s31 = int_to_ptr.hbm [resolvable:$true] %s30
      %s32 = sshll.u32 [#allocation5], 4
      %s33 = int_to_ptr.vmem [resolvable:$true] %s32
      %38 = dma.hbm_to_vmem [thread:$0]  %s31, 2048, %s33, [#allocation6], 128, 128, 8
    $region9: #{tpu_custom_call.1} parent=1 // pred_fallthru
      _
    // Predicated region
    $region10: #{tpu_custom_call.1} parent=1 // pred_check
      _
    $region11: #{tpu_custom_call.1} parent=1 // pred_check_branch
      %40 = sbr.rel (0) target = $region13
    $region12: #{tpu_custom_call.1} parent=1 // pred_region
      _
    $region13: #{tpu_custom_call.1} parent=1 // pred_fallthru
      _
    // Predicated region
    $region14: #{tpu_custom_call.1} parent=1 // pred_check
      _
    $region15: #{tpu_custom_call.1} parent=1 // pred_check_branch
      %42 = sbr.rel (0) target = $region17
    $region16: #{tpu_custom_call.1} parent=1 // pred_region
      %44 = vsyncadd [#allocation6], 0
      %s45 = sshll.u32 %s3, 4
      %s46 = int_to_ptr.hbm [resolvable:$true] %s45
      %s47 = sshll.u32 [#allocation7], 4
      %s48 = int_to_ptr.vmem [resolvable:$true] %s47
      %53 = dma.hbm_to_vmem [thread:$0]  %s46, 2048, %s48, [#allocation6], 128, 128, 8
    $region17: #{tpu_custom_call.1} parent=1 // pred_fallthru
      _
    // Predicated region
    $region18: #{tpu_custom_call.1} parent=1 // pred_check
      _
    $region19: #{tpu_custom_call.1} parent=1 // pred_check_branch
      %55 = sbr.rel (0) target = $region21
    $region20: #{tpu_custom_call.1} parent=1 // pred_region
      _
    $region21: #{tpu_custom_call.1} parent=1 // pred_fallthru
      _
    // Predicated region
    $region22: #{tpu_custom_call.1} parent=1 // pred_check
      _
    $region23: #{tpu_custom_call.1} parent=1 // pred_check_branch
      %57 = sbr.rel (0) target = $region25
    $region24: #{tpu_custom_call.1} parent=1 // pred_region
      %59 = dma.done [#allocation3], 2048
    $region25: #{tpu_custom_call.1} parent=1 // pred_fallthru
      _
    // Predicated region
    $region26: #{tpu_custom_call.1} parent=1 // pred_check
      _
    $region27: #{tpu_custom_call.1} parent=1 // pred_check_branch
      %61 = sbr.rel (0) target = $region29
    $region28: #{tpu_custom_call.1} parent=1 // pred_region
      %63 = dma.done [#allocation6], 2048
    $region29: #{tpu_custom_call.1} parent=1 // pred_fallthru
      _
    // Predicated region
    $region30: #{tpu_custom_call.1} parent=1 // pred_check
      _
    $region31: #{tpu_custom_call.1} parent=1 // pred_check_branch
      %65 = sbr.rel (0) target = $region33
    $region32: #{tpu_custom_call.1} parent=1 // pred_region
      %67 = dma.done [#allocation6], 2048
    $region33: #{tpu_custom_call.1} parent=1 // pred_fallthru
      _
    %v68 = vld [vmem:[#allocation2] sm:$0xff]
    %v69 = vld [vmem:[#allocation2 + $0x8] sm:$0xff]
    %v70 = vld [vmem:[#allocation2 + $0x10] sm:$0xff]
    %v71 = vld [vmem:[#allocation2 + $0x18] sm:$0xff]
    %v72 = vld [vmem:[#allocation2 + $0x20] sm:$0xff]
    %v73 = vld [vmem:[#allocation2 + $0x28] sm:$0xff]
    %v74 = vld [vmem:[#allocation2 + $0x30] sm:$0xff]
    %v75 = vld [vmem:[#allocation2 + $0x38] sm:$0xff]
    %v76 = vld [vmem:[#allocation2 + $0x40] sm:$0xff]
    %v77 = vld [vmem:[#allocation2 + $0x48] sm:$0xff]
    %v78 = vld [vmem:[#allocation2 + $0x50] sm:$0xff]
    %v79 = vld [vmem:[#allocation2 + $0x58] sm:$0xff]
    %v80 = vld [vmem:[#allocation2 + $0x60] sm:$0xff]
    %v81 = vld [vmem:[#allocation2 + $0x68] sm:$0xff]
    %v82 = vld [vmem:[#allocation2 + $0x70] sm:$0xff]
    %v83 = vld [vmem:[#allocation2 + $0x78] sm:$0xff]
    %v84 = vld [vmem:[#allocation5] sm:$0xff]
    %v85 = vld [vmem:[#allocation5 + $0x8] sm:$0xff]
    %v86 = vld [vmem:[#allocation5 + $0x10] sm:$0xff]
    %v87 = vld [vmem:[#allocation5 + $0x18] sm:$0xff]
    %v88 = vld [vmem:[#allocation5 + $0x20] sm:$0xff]
    %v89 = vld [vmem:[#allocation5 + $0x28] sm:$0xff]
    %v90 = vld [vmem:[#allocation5 + $0x30] sm:$0xff]
    %v91 = vld [vmem:[#allocation5 + $0x38] sm:$0xff]
    %v92 = vld [vmem:[#allocation5 + $0x40] sm:$0xff]
    %v93 = vld [vmem:[#allocation5 + $0x48] sm:$0xff]
    %v94 = vld [vmem:[#allocation5 + $0x50] sm:$0xff]
    %v95 = vld [vmem:[#allocation5 + $0x58] sm:$0xff]
    %v96 = vld [vmem:[#allocation5 + $0x60] sm:$0xff]
    %v97 = vld [vmem:[#allocation5 + $0x68] sm:$0xff]
    %v98 = vld [vmem:[#allocation5 + $0x70] sm:$0xff]
    %v99 = vld [vmem:[#allocation5 + $0x78] sm:$0xff]
    %v100 = vld [vmem:[%s2] sm:$0x1]
    %v102 = vperm.slane %v100, 0
    %104 = vmatpush.msra.mxu0 %v99
    %105 = vmatpush.msra.mxu0 %v98
    %106 = vmatpush.msra.mxu0 %v97
    %107 = vmatpush.msra.mxu0 %v96
    %108 = vmatpush.msra.mxu0 %v95
    %109 = vmatpush.msra.mxu0 %v94
    %110 = vmatpush.msra.mxu0 %v93
    %111 = vmatpush.msra.mxu0 %v92
    %112 = vmatpush.msra.mxu0 %v91
    %113 = vmatpush.msra.mxu0 %v90
    %114 = vmatpush.msra.mxu0 %v89
    %115 = vmatpush.msra.mxu0 %v88
    %116 = vmatpush.msra.mxu0 %v87
    %117 = vmatpush.msra.mxu0 %v86
    %118 = vmatpush.msra.mxu0 %v85
    %119 = vmatpush.msra.mxu0 %v84
    %120 = vmatmul.f32.gmra.mxu0 %v68
    %v121 = vpop.f32.mrf.mxu0
    %v122 = vadd.f32 %v102, %v121
    %123 = vmatmul.f32.gmra.mxu0 %v69
    %v124 = vpop.f32.mrf.mxu0
    %v125 = vadd.f32 %v102, %v124
    %126 = vmatmul.f32.gmra.mxu0 %v70
    %v127 = vpop.f32.mrf.mxu0
    %v128 = vadd.f32 %v102, %v127
    %129 = vmatmul.f32.gmra.mxu0 %v71
    %v130 = vpop.f32.mrf.mxu0
    %v131 = vadd.f32 %v102, %v130
    %132 = vmatmul.f32.gmra.mxu0 %v72
    %v133 = vpop.f32.mrf.mxu0
    %v134 = vadd.f32 %v102, %v133
    %135 = vmatmul.f32.gmra.mxu0 %v73
    %v136 = vpop.f32.mrf.mxu0
    %v137 = vadd.f32 %v102, %v136
    %138 = vmatmul.f32.gmra.mxu0 %v74
    %v139 = vpop.f32.mrf.mxu0
    %v140 = vadd.f32 %v102, %v139
    %141 = vmatmul.f32.gmra.mxu0 %v75
    %v142 = vpop.f32.mrf.mxu0
    %v143 = vadd.f32 %v102, %v142
    %144 = vmatmul.f32.gmra.mxu0 %v76
    %v145 = vpop.f32.mrf.mxu0
    %v146 = vadd.f32 %v102, %v145
    %147 = vmatmul.f32.gmra.mxu0 %v77
    %v148 = vpop.f32.mrf.mxu0
    %v149 = vadd.f32 %v102, %v148
    %150 = vmatmul.f32.gmra.mxu0 %v78
    %v151 = vpop.f32.mrf.mxu0
    %v152 = vadd.f32 %v102, %v151
    %153 = vmatmul.f32.gmra.mxu0 %v79
    %v154 = vpop.f32.mrf.mxu0
    %v155 = vadd.f32 %v102, %v154
    %156 = vmatmul.f32.gmra.mxu0 %v80
    %v157 = vpop.f32.mrf.mxu0
    %v158 = vadd.f32 %v102, %v157
    %159 = vmatmul.f32.gmra.mxu0 %v81
    %v160 = vpop.f32.mrf.mxu0
    %v161 = vadd.f32 %v102, %v160
    %162 = vmatmul.f32.gmra.mxu0 %v82
    %v163 = vpop.f32.mrf.mxu0
    %v164 = vadd.f32 %v102, %v163
    %165 = vmatmul.f32.gmra.mxu0 %v83
    %v166 = vpop.f32.mrf.mxu0
    %v167 = vadd.f32 %v102, %v166
    %168 = vdwg.mxu0
    %v169 = vmax.f32 %v122, 0.0
    %v170 = vmax.f32 %v125, 0.0
    %v171 = vmax.f32 %v128, 0.0
    %v172 = vmax.f32 %v131, 0.0
    %v173 = vmax.f32 %v134, 0.0
    %v174 = vmax.f32 %v137, 0.0
    %v175 = vmax.f32 %v140, 0.0
    %v176 = vmax.f32 %v143, 0.0
    %v177 = vmax.f32 %v146, 0.0
    %v178 = vmax.f32 %v149, 0.0
    %v179 = vmax.f32 %v152, 0.0
    %v180 = vmax.f32 %v155, 0.0
    %v181 = vmax.f32 %v158, 0.0
    %v182 = vmax.f32 %v161, 0.0
    %v183 = vmax.f32 %v164, 0.0
    %v184 = vmax.f32 %v167, 0.0
    %v185 = vld [vmem:[#allocation7] sm:$0xff]
    %v186 = vld [vmem:[#allocation7 + $0x8] sm:$0xff]
    %v187 = vld [vmem:[#allocation7 + $0x10] sm:$0xff]
    %v188 = vld [vmem:[#allocation7 + $0x18] sm:$0xff]
    %v189 = vld [vmem:[#allocation7 + $0x20] sm:$0xff]
    %v190 = vld [vmem:[#allocation7 + $0x28] sm:$0xff]
    %v191 = vld [vmem:[#allocation7 + $0x30] sm:$0xff]
    %v192 = vld [vmem:[#allocation7 + $0x38] sm:$0xff]
    %v193 = vld [vmem:[#allocation7 + $0x40] sm:$0xff]
    %v194 = vld [vmem:[#allocation7 + $0x48] sm:$0xff]
    %v195 = vld [vmem:[#allocation7 + $0x50] sm:$0xff]
    %v196 = vld [vmem:[#allocation7 + $0x58] sm:$0xff]
    %v197 = vld [vmem:[#allocation7 + $0x60] sm:$0xff]
    %v198 = vld [vmem:[#allocation7 + $0x68] sm:$0xff]
    %v199 = vld [vmem:[#allocation7 + $0x70] sm:$0xff]
    %v200 = vld [vmem:[#allocation7 + $0x78] sm:$0xff]
    %v201 = vld [vmem:[%s4] sm:$0x1]
    %v203 = vperm.slane %v201, 0
    %205 = vmatpush.msra.mxu0 %v200
    %206 = vmatpush.msra.mxu0 %v199
    %207 = vmatpush.msra.mxu0 %v198
    %208 = vmatpush.msra.mxu0 %v197
    %209 = vmatpush.msra.mxu0 %v196
    %210 = vmatpush.msra.mxu0 %v195
    %211 = vmatpush.msra.mxu0 %v194
    %212 = vmatpush.msra.mxu0 %v193
    %213 = vmatpush.msra.mxu0 %v192
    %214 = vmatpush.msra.mxu0 %v191
    %215 = vmatpush.msra.mxu0 %v190
    %216 = vmatpush.msra.mxu0 %v189
    %217 = vmatpush.msra.mxu0 %v188
    %218 = vmatpush.msra.mxu0 %v187
    %219 = vmatpush.msra.mxu0 %v186
    %220 = vmatpush.msra.mxu0 %v185
    %221 = vmatmul.f32.gmra.mxu0 %v169
    %v222 = vpop.f32.mrf.mxu0
    %v223 = vadd.f32 %v203, %v222
    %224 = vmatmul.f32.gmra.mxu0 %v170
    %v225 = vpop.f32.mrf.mxu0
    %v226 = vadd.f32 %v203, %v225
    %227 = vmatmul.f32.gmra.mxu0 %v171
    %v228 = vpop.f32.mrf.mxu0
    %v229 = vadd.f32 %v203, %v228
    %230 = vmatmul.f32.gmra.mxu0 %v172
    %v231 = vpop.f32.mrf.mxu0
    %v232 = vadd.f32 %v203, %v231
    %233 = vmatmul.f32.gmra.mxu0 %v173
    %v234 = vpop.f32.mrf.mxu0
    %v235 = vadd.f32 %v203, %v234
    %236 = vmatmul.f32.gmra.mxu0 %v174
    %v237 = vpop.f32.mrf.mxu0
    %v238 = vadd.f32 %v203, %v237
    %239 = vmatmul.f32.gmra.mxu0 %v175
    %v240 = vpop.f32.mrf.mxu0
    %v241 = vadd.f32 %v203, %v240
    %242 = vmatmul.f32.gmra.mxu0 %v176
    %v243 = vpop.f32.mrf.mxu0
    %v244 = vadd.f32 %v203, %v243
    %245 = vmatmul.f32.gmra.mxu0 %v177
    %v246 = vpop.f32.mrf.mxu0
    %v247 = vadd.f32 %v203, %v246
    %248 = vmatmul.f32.gmra.mxu0 %v178
    %v249 = vpop.f32.mrf.mxu0
    %v250 = vadd.f32 %v203, %v249
    %251 = vmatmul.f32.gmra.mxu0 %v179
    %v252 = vpop.f32.mrf.mxu0
    %v253 = vadd.f32 %v203, %v252
    %254 = vmatmul.f32.gmra.mxu0 %v180
    %v255 = vpop.f32.mrf.mxu0
    %v256 = vadd.f32 %v203, %v255
    %257 = vmatmul.f32.gmra.mxu0 %v181
    %v258 = vpop.f32.mrf.mxu0
    %v259 = vadd.f32 %v203, %v258
    %260 = vmatmul.f32.gmra.mxu0 %v182
    %v261 = vpop.f32.mrf.mxu0
    %v262 = vadd.f32 %v203, %v261
    %263 = vmatmul.f32.gmra.mxu0 %v183
    %v264 = vpop.f32.mrf.mxu0
    %v265 = vadd.f32 %v203, %v264
    %266 = vmatmul.f32.gmra.mxu0 %v184
    %v267 = vpop.f32.mrf.mxu0
    %v268 = vadd.f32 %v203, %v267
    %269 = vdwg.mxu0
    %270 = vst [vmem:[#allocation8] sm:$0xff] %v223
    %271 = vst [vmem:[#allocation8 + $0x8] sm:$0xff] %v226
    %272 = vst [vmem:[#allocation8 + $0x10] sm:$0xff] %v229
    %273 = vst [vmem:[#allocation8 + $0x18] sm:$0xff] %v232
    %274 = vst [vmem:[#allocation8 + $0x20] sm:$0xff] %v235
    %275 = vst [vmem:[#allocation8 + $0x28] sm:$0xff] %v238
    %276 = vst [vmem:[#allocation8 + $0x30] sm:$0xff] %v241
    %277 = vst [vmem:[#allocation8 + $0x38] sm:$0xff] %v244
    %278 = vst [vmem:[#allocation8 + $0x40] sm:$0xff] %v247
    %279 = vst [vmem:[#allocation8 + $0x48] sm:$0xff] %v250
    %280 = vst [vmem:[#allocation8 + $0x50] sm:$0xff] %v253
    %281 = vst [vmem:[#allocation8 + $0x58] sm:$0xff] %v256
    %282 = vst [vmem:[#allocation8 + $0x60] sm:$0xff] %v259
    %283 = vst [vmem:[#allocation8 + $0x68] sm:$0xff] %v262
    %284 = vst [vmem:[#allocation8 + $0x70] sm:$0xff] %v265
    %285 = vst [vmem:[#allocation8 + $0x78] sm:$0xff] %v268
    // Predicated region
    $region34: #{tpu_custom_call.1} parent=1 // pred_check
      _
    $region35: #{tpu_custom_call.1} parent=1 // pred_check_branch
      %287 = sbr.rel (0) target = $region37
    $region36: #{tpu_custom_call.1} parent=1 // pred_region
      %289 = vsyncadd [#allocation4], 0
      %s290 = sshll.u32 [#allocation8], 4
      %s291 = int_to_ptr.vmem [resolvable:$true] %s290
      %s292 = sshll.u32 %s5, 4
      %s293 = int_to_ptr.hbm [resolvable:$true] %s292
      %298 = dma.vmem_to_hbm [thread:$0]  %s291, 2048, %s293, [#allocation4], 128, 128, 8
    $region37: #{tpu_custom_call.1} parent=1 // pred_fallthru
      _
    // Predicated region
    $region38: #{tpu_custom_call.1} parent=1 // pred_check
      _
    $region39: #{tpu_custom_call.1} parent=1 // pred_check_branch
      %300 = sbr.rel (0) target = $region41
    $region40: #{tpu_custom_call.1} parent=1 // pred_region
      %302 = dma.done [#allocation4], 2048
    $region41: #{tpu_custom_call.1} parent=1 // pred_fallthru
      _
    %303 = vsyncpa [#allocation3], 1
    %304 = vsyncpa [#allocation6], 1
    %305 = vsyncpa [#allocation4], 1

</llo_original>
